<compile_context>
chip_gen: v5e
topology: v5e:2x2
jax: 0.10.0
libtpu: 0.0.40
codegen_flags: <defaults>
</compile_context>

<pallas_src>
import functools

import numpy as np
import jax
import jax.numpy as jnp
from jax.experimental import pallas as pl
from jax.experimental.pallas import tpu as pltpu


# ---------------------------------------------------------------------------
# Kernel: block-sparse SpMM,  O = maybe_relu(A @ B)
# Grid = (nnz_blocks,); nonzero (tm, tk) blocks of A are visited in row-tile
# order; accumulator init/flush happens on row-tile boundaries.
# ---------------------------------------------------------------------------
def _spmm_kernel(rows_ref, cols_ref, a_ref, b_ref, o_ref, acc_ref,
                 *, tk, apply_relu):
    s = pl.program_id(0)
    last = pl.num_programs(0) - 1

    row = rows_ref[s]
    prev_row = rows_ref[jnp.maximum(s - 1, 0)]
    next_row = rows_ref[jnp.minimum(s + 1, last)]

    @pl.when(jnp.logical_or(s == 0, prev_row != row))
    def _init():
        acc_ref[...] = jnp.zeros_like(acc_ref)

    # Slice the matching row panel of the VMEM-resident dense operand.
    off = pl.multiple_of(cols_ref[s] * tk, tk)
    acc_ref[...] += jnp.dot(a_ref[...], b_ref[pl.ds(off, tk), :],
                            preferred_element_type=jnp.float32)

    @pl.when(jnp.logical_or(s == last, next_row != row))
    def _flush():
        h = acc_ref[...]
        if apply_relu:
            h = jnp.maximum(h, 0.0)
        o_ref[...] = h.astype(o_ref.dtype)


def blocksparse_spmm(a_pad, b_pad, blk_rows, blk_cols, *, tm, tk,
                     apply_relu, out_dtype):
    """O[n_pad, c_pad] = maybe_relu(A[n_pad, n_pad] @ B[n_pad, c_pad])."""
    n_pad = a_pad.shape[0]
    c_pad = b_pad.shape[1]
    nnz = int(blk_rows.shape[0])
    kernel = functools.partial(_spmm_kernel, tk=tk, apply_relu=apply_relu)

    return pl.pallas_call(
        kernel,
        out_shape=jax.ShapeDtypeStruct((n_pad, c_pad), out_dtype),
        grid_spec=pltpu.PrefetchScalarGridSpec(
            num_scalar_prefetch=2,            # blk_rows, blk_cols -> SMEM
            grid=(nnz,),
            in_specs=[
                # Nonzero (tm, tk) block of A for this grid step.
                pl.BlockSpec((tm, tk),
                             lambda s, rows, cols: (rows[s], cols[s])),
                # Full dense operand stays resident in VMEM (constant index).
                pl.BlockSpec((n_pad, c_pad),
                             lambda s, rows, cols: (0, 0)),
            ],
            out_specs=pl.BlockSpec((tm, c_pad),
                                   lambda s, rows, cols: (rows[s], 0)),
            scratch_shapes=[pltpu.VMEM((tm, c_pad), jnp.float32)],
        ),
        compiler_params=pltpu.CompilerParams(
            # Single grouped-reduction axis with output revisits.
            dimension_semantics=("arbitrary",),
        ),
    )(blk_rows, blk_cols, a_pad, b_pad)


# ---------------------------------------------------------------------------
# Per-graph (static) preprocessing -- done ONCE and cached by the caller.
# ---------------------------------------------------------------------------
def _round_up(v, m):
    return (v + m - 1) // m * m


def _pad2d(x, rows, cols):
    return jnp.pad(x, ((0, rows - x.shape[0]), (0, cols - x.shape[1])))


def _pick_tiles(num_nodes):
    """MXU-matched contraction tile + a fat row tile (fewer ~600-cycle steps)."""
    try:
        kind = jax.devices()[0].device_kind.lower()
    except Exception:  # pragma: no cover
        kind = ""
    tk = 256 if ("v6" in kind or "v7" in kind) else 128   # v5e/v4 MXU is 128-deep
    tm = 256
    n_pad = _round_up(num_nodes, max(tm, tk))
    if n_pad <= 512:
        tm = n_pad           # whole padded graph in a single row tile
    return tm, tk, n_pad


def prepare_graph(edge_index_with_loops, deg_inv_sqrt, num_nodes, *, tm, tk, n_pad):
    """Build padded bf16 A_norm + the flat (row-grouped) nonzero-block lists."""
    ei = np.asarray(edge_index_with_loops)
    dis = np.asarray(deg_inv_sqrt, dtype=np.float32)
    row, col = ei[0], ei[1]                 # row = destination, col = source

    # O(E) COO scatter-add (no [E, N] one-hot blowup).
    a = np.zeros((n_pad, n_pad), np.float32)
    np.add.at(a, (row, col), dis[row] * dis[col])

    # Block-sparsity structure: flat list of nonzero (tm, tk) blocks, grouped
    # (contiguously, row-major) by row tile.
    r, kb = n_pad // tm, n_pad // tk
    occ = np.abs(a).reshape(r, tm, kb, tk).sum(axis=(1, 3)) > 0       # [r, kb]
    assert occ.any(axis=1).all(), "row tile with no nonzero blocks"
    blk_rows, blk_cols = np.nonzero(occ)    # row-major => grouped by row tile

    return (jnp.asarray(a, dtype=jnp.bfloat16),
            jnp.asarray(blk_rows.astype(np.int32)),
            jnp.asarray(blk_cols.astype(np.int32)))


# ---------------------------------------------------------------------------
# Forward pass (graph structure pre-built and passed in).
# ---------------------------------------------------------------------------
def gcn_forward(x, w1, w2, graph, *, num_nodes):
    a_pad, blk_rows, blk_cols, tm, tk = graph
    n_pad = a_pad.shape[0]
    c_hid = w1.shape[1]
    c_out = w2.shape[1]
    c_hid_p = _round_up(c_hid, 128)
    c_out_p = _round_up(c_out, 128)

    # ---- Layer 1, reordered: (A @ X) @ W1 == A @ (X @ W1). -----------------
    xw1 = x @ w1                                           # tiny dense, XLA
    xw1_p = _pad2d(xw1, n_pad, c_hid_p).astype(jnp.bfloat16)
    h = blocksparse_spmm(a_pad, xw1_p, blk_rows, blk_cols, tm=tm, tk=tk,
                         apply_relu=True, out_dtype=jnp.float32)

    # dropout(p=0.2): eval-mode identity (deterministic forward).

    # ---- Layer 2, reordered: (A @ H) @ W2 == A @ (H @ W2). -----------------
    hw2 = h[:, :c_hid] @ w2                                # tiny dense, XLA
    hw2_p = _pad2d(hw2, n_pad, c_out_p).astype(jnp.bfloat16)
    out = blocksparse_spmm(a_pad, hw2_p, blk_rows, blk_cols, tm=tm, tk=tk,
                           apply_relu=False, out_dtype=jnp.float32)

    return out[:num_nodes, :c_out]


# ---------------------------------------------------------------------------
if __name__ == "__main__":
    key = jax.random.PRNGKey(0)
    k_x, k_w1, k_w2 = jax.random.split(key, 3)

    # Ring graph with self loops: exercises multiple column blocks per row tile.
    num_nodes = 512
    in_channels = 16
    hidden_channels = 32
    out_channels = 8

    nodes = np.arange(num_nodes, dtype=np.int32)
    nxt = (nodes + 1) % num_nodes
    dst = np.concatenate([nodes, nxt, nodes])              # destinations
    src = np.concatenate([nxt, nodes, nodes])              # sources (+ self loops)
    edge_index_with_loops = np.stack([dst, src], axis=0)   # [2, 3N]

    deg = np.zeros((num_nodes,), np.float32)
    np.add.at(deg, dst, 1.0)
    deg_inv_sqrt = np.where(deg > 0, 1.0 / np.sqrt(deg), 0.0).astype(np.float32)

    x = jax.random.normal(k_x, (num_nodes, in_channels), dtype=jnp.float32)
    w1 = jax.random.normal(k_w1, (in_channels, hidden_channels), jnp.float32) * 0.01
    w2 = jax.random.normal(k_w2, (hidden_channels, out_channels), jnp.float32) * 0.01

    # One-time per-graph preprocessing (static graph -> cached across forwards).
    tm, tk, n_pad = _pick_tiles(num_nodes)
    a_pad, blk_rows, blk_cols = prepare_graph(
        edge_index_with_loops, deg_inv_sqrt, num_nodes, tm=tm, tk=tk, n_pad=n_pad)
    graph = (a_pad, blk_rows, blk_cols, tm, tk)

    out = gcn_forward(x, w1, w2, graph, num_nodes=num_nodes)
    out = jax.block_until_ready(out)

    # Pure-JAX f32 reference mirroring the PyTorch module (eval mode).
    ei = jnp.asarray(edge_index_with_loops)
    dis = jnp.asarray(deg_inv_sqrt)
    norm = dis[ei[0]] * dis[ei[1]]
    a_ref = jnp.zeros((num_nodes, num_nodes), jnp.float32).at[ei[0], ei[1]].add(norm)
    ref = (a_ref @ jnp.maximum((a_ref @ x) @ w1, 0.0)) @ w2

    assert out.shape == (num_nodes, out_channels)
    err = float(jnp.max(jnp.abs(out - ref)))
    scale = float(jnp.max(jnp.abs(ref))) + 1e-12
    assert err <= 0.05 * scale, f"mismatch vs reference: max err {err}, scale {scale}"

    print("KERNEL_OK")
</pallas_src>

<mosaic_0001>
module attributes {stable_mosaic.version = 11 : i64} {
  func.func @_spmm_kernel(%arg0: i32, %arg1: memref<4xi32, #tpu.memory_space<smem>>, %arg2: memref<4xi32, #tpu.memory_space<smem>>, %arg3: memref<512x128xbf16, #tpu.memory_space<vmem>>, %arg4: memref<512x128xbf16, #tpu.memory_space<vmem>>, %arg5: memref<512x128xf32, #tpu.memory_space<vmem>>, %arg6: memref<512x128xf32, #tpu.memory_space<vmem>>) attributes {dimension_semantics = [#tpu.dimension_semantics<arbitrary>], iteration_bounds = array<i64: 4>, scalar_prefetch = 2 : i64, scratch_operands = 1 : i64, tpu.core_type = #tpu.core_type<tc>, window_params = [{transform_indices = @transform_0, window_bounds = array<i64: 512, 128>}, {pipeline_mode = #tpu.pipeline_mode<synchronous>, transform_indices = @transform_1, window_bounds = array<i64: 512, 128>}, {transform_indices = @transform_2, window_bounds = array<i64: 512, 128>}]} {
    %0 = arith.index_cast %arg0 : i32 to index
    %1 = memref.load %arg1[%0] : memref<4xi32, #tpu.memory_space<smem>>
    %c1_i32 = arith.constant 1 : i32
    %2 = arith.subi %arg0, %c1_i32 : i32
    %c0_i32 = arith.constant 0 : i32
    %3 = arith.maxsi %2, %c0_i32 : i32
    %4 = arith.index_cast %3 : i32 to index
    %5 = memref.load %arg1[%4] : memref<4xi32, #tpu.memory_space<smem>>
    %c1_i32_0 = arith.constant 1 : i32
    %6 = arith.addi %arg0, %c1_i32_0 : i32
    %c3_i32 = arith.constant 3 : i32
    %7 = arith.minsi %6, %c3_i32 : i32
    %8 = arith.index_cast %7 : i32 to index
    %9 = memref.load %arg1[%8] : memref<4xi32, #tpu.memory_space<smem>>
    %c0_i32_1 = arith.constant 0 : i32
    %10 = arith.cmpi eq, %arg0, %c0_i32_1 : i32
    %11 = arith.cmpi ne, %5, %1 : i32
    %12 = arith.ori %10, %11 : i1
    %13 = arith.extui %12 : i1 to i32
    %c0_i32_2 = arith.constant 0 : i32
    %14 = arith.cmpi ne, %13, %c0_i32_2 : i32
    scf.if %14 {
      %cst_11 = arith.constant 0.000000e+00 : f32
      %31 = vector.broadcast %cst_11 : f32 to vector<512x128xf32>
      %c0_12 = arith.constant 0 : index
      %c0_13 = arith.constant 0 : index
      %32 = vector.load %arg6[%c0_12, %c0_13] : memref<512x128xf32, #tpu.memory_space<vmem>>, vector<512x128xf32>
      tpu.vector_store %arg6[%c0_12, %c0_13], %31 {strides = array<i32>} : memref<512x128xf32, #tpu.memory_space<vmem>>, vector<512x128xf32>,
    } else {
    }
    %15 = arith.index_cast %arg0 : i32 to index
    %16 = memref.load %arg2[%15] : memref<4xi32, #tpu.memory_space<smem>>
    %c128_i32 = arith.constant 128 : i32
    %17 = arith.muli %16, %c128_i32 : i32
    %18 = tpu.assume_multiple %17, 128 : i32
    %c0 = arith.constant 0 : index
    %c0_3 = arith.constant 0 : index
    %19 = vector.load %arg6[%c0, %c0_3] : memref<512x128xf32, #tpu.memory_space<vmem>>, vector<512x128xf32>
    %c0_4 = arith.constant 0 : index
    %c0_5 = arith.constant 0 : index
    %20 = vector.load %arg3[%c0_4, %c0_5] : memref<512x128xbf16, #tpu.memory_space<vmem>>, vector<512x128xbf16>
    %21 = arith.index_cast %18 : i32 to index
    %c0_6 = arith.constant 0 : index
    %22 = vector.load %arg4[%21, %c0_6] : memref<512x128xbf16, #tpu.memory_space<vmem>>, vector<128x128xbf16>
    %cst = arith.constant dense<0.000000e+00> : vector<512x128xf32>
    %23 = tpu.matmul %20, %22, %cst {dimension_numbers = #tpu.dot_dimension_numbers<[1], [0], [0], [1], [0, 0, 1, 1], [], []>} : vector<512x128xbf16>, vector<128x128xbf16>, vector<512x128xf32> -> vector<512x128xf32>
    %24 = arith.addf %19, %23 : vector<512x128xf32>
    %c0_7 = arith.constant 0 : index
    %c0_8 = arith.constant 0 : index
    %25 = vector.load %arg6[%c0_7, %c0_8] : memref<512x128xf32, #tpu.memory_space<vmem>>, vector<512x128xf32>
    tpu.vector_store %arg6[%c0_7, %c0_8], %24 {strides = array<i32>} : memref<512x128xf32, #tpu.memory_space<vmem>>, vector<512x128xf32>,
    %c3_i32_9 = arith.constant 3 : i32
    %26 = arith.cmpi eq, %arg0, %c3_i32_9 : i32
    %27 = arith.cmpi ne, %9, %1 : i32
    %28 = arith.ori %26, %27 : i1
    %29 = arith.extui %28 : i1 to i32
    %c0_i32_10 = arith.constant 0 : i32
    %30 = arith.cmpi ne, %29, %c0_i32_10 : i32
    scf.if %30 {
      %c0_11 = arith.constant 0 : index
      %c0_12 = arith.constant 0 : index
      %31 = vector.load %arg6[%c0_11, %c0_12] : memref<512x128xf32, #tpu.memory_space<vmem>>, vector<512x128xf32>
      %cst_13 = arith.constant 0.000000e+00 : f32
      %32 = vector.broadcast %cst_13 : f32 to vector<512x128xf32>
      %33 = arith.maximumf %31, %32 : vector<512x128xf32>
      %c0_14 = arith.constant 0 : index
      %c0_15 = arith.constant 0 : index
      %34 = vector.load %arg5[%c0_14, %c0_15] : memref<512x128xf32, #tpu.memory_space<vmem>>, vector<512x128xf32>
      tpu.vector_store %arg5[%c0_14, %c0_15], %33 {strides = array<i32>} : memref<512x128xf32, #tpu.memory_space<vmem>>, vector<512x128xf32>,
    } else {
    }
    return
  }
  func.func @transform_0(%arg0: i32, %arg1: memref<4xi32, #tpu.memory_space<smem>>, %arg2: memref<4xi32, #tpu.memory_space<smem>>) -> (i32, i32) {
    %0 = arith.index_cast %arg0 : i32 to index
    %1 = memref.load %arg1[%0] : memref<4xi32, #tpu.memory_space<smem>>
    %2 = arith.index_cast %arg0 : i32 to index
    %3 = memref.load %arg2[%2] : memref<4xi32, #tpu.memory_space<smem>>
    %c0_i32 = arith.constant 0 : i32
    return %1, %3 : i32, i32
  }
  func.func @transform_1(%arg0: i32, %arg1: memref<4xi32, #tpu.memory_space<smem>>, %arg2: memref<4xi32, #tpu.memory_space<smem>>) -> (i32, i32) {
    %c0_i32 = arith.constant 0 : i32
    %c0_i32_0 = arith.constant 0 : i32
    %c0_i32_1 = arith.constant 0 : i32
    return %c0_i32, %c0_i32_0 : i32, i32
  }
  func.func @transform_2(%arg0: i32, %arg1: memref<4xi32, #tpu.memory_space<smem>>, %arg2: memref<4xi32, #tpu.memory_space<smem>>) -> (i32, i32) {
    %0 = arith.index_cast %arg0 : i32 to index
    %1 = memref.load %arg1[%0] : memref<4xi32, #tpu.memory_space<smem>>
    %c0_i32 = arith.constant 0 : i32
    %c0_i32_0 = arith.constant 0 : i32
    return %1, %c0_i32 : i32, i32
  }
}

</mosaic_0001>

<llo_original>
// kernel: tpu_custom_call.1
$region0: #{tpu_custom_call.1}
  #allocation0 [shape = 'u32[]', space=smem, size = 0x4, offset = 0x4, fixed_abs, tag = 'smem constant byte address 0x4 - core index']
  #allocation1 [shape = 'u32[72,128]{1,0:T(1,128)}', space=vmem, size = 0x9000, scoped, tag = 'internal scratch']
  #allocation2 [shape = 'f32[512,128]{1,0:T(8,128)}', space=vmem, size = 0x40000, scoped, tag = 'scratch operand']
  #allocation3 [shape = 's32[1]{0}', space=sflag, size = 0x4, scoped, tag = 'scoped memory for tpu_custom_call.1']
  #allocation4 [shape = 'u8[512]{0}', space=smem, size = 0x200, scoped, tag = 'prefetched SMEM operand 0']
  #allocation5 [shape = 'u8[512]{0}', space=smem, size = 0x200, scoped, tag = 'prefetched SMEM operand 1']
  %s0 = inlined_call_operand.hbm [shape: s32[4], index: 0, kind: input, shape index: {}]
  %s1 = inlined_call_operand.hbm [shape: s32[4], index: 1, kind: input, shape index: {}]
  %s2 = inlined_call_operand.hbm [shape: bf16[512,512], index: 2, kind: input, shape index: {}]
  %s3 = inlined_call_operand.hbm [shape: bf16[512,128], index: 3, kind: input, shape index: {}]
  %s4 = inlined_call_operand.hbm [shape: f32[512,128], index: 4, kind: output, shape index: {}]
  %s5 = sld [smem:[#allocation0]]
  $region57: #{tpu_custom_call.1} parent=0
    _
  %s7 = ssub.s32 1, %s5
  %s8 = scalar_select 0, %s7, %s5
  %s10 = sshll.u32 %s0, 4
  %s11 = int_to_ptr.hbm [resolvable:$true] %s10
  %13 = dma.hbm_to_smem %s11, 16, [#allocation4], [#allocation3]
  %s15 = sshll.u32 %s1, 4
  %s16 = int_to_ptr.hbm [resolvable:$true] %s15
  %18 = dma.hbm_to_smem %s16, 16, [#allocation5], [#allocation3]
  %20 = dma.done [#allocation3], 32
  %21 = sfence
  $region1: #{tpu_custom_call.1} parent=0
    #allocation6 [shape = 'u8[262144]{0}', space=vmem, size = 0x40000, scoped, tag = 'input window, operand 2']
    #allocation7 [shape = 's32[2]{0}', space=sflag, size = 0x8, scoped, tag = 'scoped memory for tpu_custom_call.1']
    #allocation8 [shape = 's32[2]{0}', space=sflag, size = 0x8, scoped, tag = 'scoped memory for tpu_custom_call.1']
    #allocation9 [shape = 'u8[131072]{0}', space=vmem, size = 0x20000, scoped, tag = 'input window, operand 3, single buffered']
    #allocation10 [shape = 's32[1]{0}', space=sflag, size = 0x4, scoped, tag = 'scoped memory for tpu_custom_call.1']
    #allocation11 [shape = 'u8[524288]{0}', space=vmem, size = 0x80000, scoped, tag = 'output window, operand 0']
    %22 = vsyncpa [#allocation7], 0
    %s23 = scalar_lea.sflag [#allocation7], 1
    %24 = vsyncpa %s23, 0
    %25 = vsyncpa [#allocation10], 0
    %26 = vsyncpa [#allocation8], 0
    %s27 = scalar_lea.sflag [#allocation8], 1
    %28 = vsyncpa %s27, 0
    loop: start=0, step=1, limit=6
    $region2: #{tpu_custom_call.1} parent=1 // loop_pre_header
      _
    $region3: #{tpu_custom_call.1} parent=1 // loop_header
      %s30 = sphi 0, %s34
      %p31 = scmp.ge.s32.totalorder %s30, 6
      %s46 = sphi 0, %s48
      %s49 = sphi 0, %s46
      %s50 = sphi 0, %s49
      %s66 = sphi 0, %s50
      %s70 = sphi 0, %s70
      %s72 = sphi 0, %s70
      %s73 = sphi 0, %s72
      %s87 = sphi 0, %s73
      %s95 = sphi 0, %s97
      %s98 = sphi 0, %s95
      %s99 = sphi 0, %s98
      %s115 = sphi 0, %s99
    $region4: #{tpu_custom_call.1} parent=1 // loop_header_branch
      %33 = sbr.rel (%p31) target = $region8
    $region5: #{tpu_custom_call.1} parent=1 // loop_body
      %s35 = ssub.s32 %s30, 1
      %s36 = ssub.s32 %s30, 2
      %s37 = sadd.s32 %s30, 1
      %s38 = sld [smem:[#allocation4 + %s30]]
      %s39 = sld [smem:[#allocation5 + %s30]]
      %s40 = sld [smem:[#allocation4 + %s37]]
      %s41 = sld [smem:[#allocation5 + %s37]]
      %s42 = ssub.s32 %s38, %s40
      %s43 = ssub.s32 %s39, %s41
      %s44 = sor.u32 %s42, %s43
      %p45 = scmp.eq.s32.totalorder %s44, 0
      %s47 = sadd.s32 %s46, 1
      %s48 = scalar_select %p45, %s46, %s47
      %p51 = pneg %p45
      %p52 = scmp.eq.s32.totalorder %s30, 3
      %p53 = por %p51, %p52
      %p54 = scmp.ne.s32.totalorder %s46, %s49
      %p55 = scmp.eq.s32.totalorder %s30, 0
      %p56 = por %p54, %p55
      %p57 = scmp.ne.s32.totalorder %s46, %s49
      %p58 = scmp.eq.s32.totalorder %s35, 3
      %p59 = por %p57, %p58
      %p60 = scmp.ne.s32.totalorder %s49, %s50
      %p61 = scmp.eq.s32.totalorder %s35, 0
      %p62 = por %p60, %p61
      %p63 = scmp.ne.s32.totalorder %s49, %s50
      %p64 = scmp.eq.s32.totalorder %s36, 3
      %p65 = por %p63, %p64
      %p67 = scmp.ne.s32.totalorder %s50, %s66
      %p68 = scmp.eq.s32.totalorder %s36, 0
      %p69 = por %p67, %p68
      %s71 = sadd.s32 %s70, 1
      %p74 = scmp.eq.s32.totalorder %s30, 3
      %p75 = scmp.ne.s32.totalorder %s70, %s72
      %p76 = scmp.eq.s32.totalorder %s30, 0
      %p77 = por %p75, %p76
      %p78 = scmp.ne.s32.totalorder %s70, %s72
      %p79 = scmp.eq.s32.totalorder %s35, 3
      %p80 = por %p78, %p79
      %p81 = scmp.ne.s32.totalorder %s72, %s73
      %p82 = scmp.eq.s32.totalorder %s35, 0
      %p83 = por %p81, %p82
      %p84 = scmp.ne.s32.totalorder %s72, %s73
      %p85 = scmp.eq.s32.totalorder %s36, 3
      %p86 = por %p84, %p85
      %p88 = scmp.ne.s32.totalorder %s73, %s87
      %p89 = scmp.eq.s32.totalorder %s36, 0
      %p90 = por %p88, %p89
      %s91 = sld [smem:[#allocation4 + %s30]]
      %s92 = sld [smem:[#allocation4 + %s37]]
      %s93 = ssub.s32 %s91, %s92
      %p94 = scmp.eq.s32.totalorder %s93, 0
      %s96 = sadd.s32 %s95, 1
      %s97 = scalar_select %p94, %s95, %s96
      %p100 = pneg %p94
      %p101 = scmp.eq.s32.totalorder %s30, 3
      %p102 = por %p100, %p101
      %p103 = scmp.ne.s32.totalorder %s95, %s98
      %p104 = scmp.eq.s32.totalorder %s30, 0
      %p105 = por %p103, %p104
      %p106 = scmp.ne.s32.totalorder %s95, %s98
      %p107 = scmp.eq.s32.totalorder %s35, 3
      %p108 = por %p106, %p107
      %p109 = scmp.ne.s32.totalorder %s98, %s99
      %p110 = scmp.eq.s32.totalorder %s35, 0
      %p111 = por %p109, %p110
      %p112 = scmp.ne.s32.totalorder %s98, %s99
      %p113 = scmp.eq.s32.totalorder %s36, 3
      %p114 = por %p112, %p113
      %p116 = scmp.ne.s32.totalorder %s99, %s115
      %p117 = scmp.eq.s32.totalorder %s36, 0
      %p118 = por %p116, %p117
      %p119 = scmp.le.s32.totalorder 1, %s30
      %p120 = scmp.lt.s32.totalorder %s30, 5
      %p121 = pnand %p119, %p120
      %p122 = pneg %p121
      // Predicated region
      $region9: #{tpu_custom_call.1} parent=5 // pred_check
        _
      $region10: #{tpu_custom_call.1} parent=5 // pred_check_branch
        %124 = sbr.rel (%p121) target = $region12
      $region11: #{tpu_custom_call.1} parent=5 // pred_region
        %s125 = ssub.s32 %s30, 1
        // Predicated region
        $region13: #{tpu_custom_call.1} parent=11 // pred_check
          %p126 = pneg %p83
        $region14: #{tpu_custom_call.1} parent=11 // pred_check_branch
          %128 = sbr.rel (%p126) target = $region16
        $region15: #{tpu_custom_call.1} parent=11 // pred_region
          %130 = vsyncadd [#allocation10], 0
          %s131 = sshll.u32 %s3, 4
          %s132 = int_to_ptr.hbm [resolvable:$true] %s131
          %s133 = sshll.u32 [#allocation9], 4
          %s134 = int_to_ptr.vmem [resolvable:$true] %s133
          %139 = dma.hbm_to_vmem [thread:$0]  %s132, 4096, %s134, [#allocation10], 64, 64, 4
        $region16: #{tpu_custom_call.1} parent=11 // pred_fallthru
          _
      $region12: #{tpu_custom_call.1} parent=5 // pred_fallthru
        _
      %p140 = scmp.lt.s32.totalorder %s30, 4
      // Predicated region
      $region17: #{tpu_custom_call.1} parent=5 // pred_check
        %p141 = pneg %p140
      $region18: #{tpu_custom_call.1} parent=5 // pred_check_branch
        %143 = sbr.rel (%p141) target = $region20
      $region19: #{tpu_custom_call.1} parent=5 // pred_region
        // Predicated region
        $region21: #{tpu_custom_call.1} parent=19 // pred_check
          %p144 = pneg %p56
        $region22: #{tpu_custom_call.1} parent=19 // pred_check_branch
          %146 = sbr.rel (%p144) target = $region24
        $region23: #{tpu_custom_call.1} parent=19 // pred_region
          %s147 = sand.u32 %s46, 1
          %s148 = scalar_lea.sflag [#allocation7], %s147
          %s149 = sand.u32 %s46, 1
          %s150 = smul.addr %s149, 256
          %s151 = scalar_lea.vmem [#allocation6], %s150
          %s152 = sld [smem:[#allocation4 + %s30]]
          %s153 = sld [smem:[#allocation5 + %s30]]
          %s154 = smul.u32 64, %s152
          %156 = vsyncadd %s148, 0
          %s157 = smul.addr %s154, 4
          %s158 = sadd.s32 %s153, %s157
          %s159 = smul.addr %s158, 4
          %s160 = scalar_lea.hbm %s2, %s159
          %s161 = sshll.u32 %s160, 4
          %s162 = int_to_ptr.hbm [resolvable:$true] %s161
          %s163 = sshll.u32 %s151, 4
          %s164 = int_to_ptr.vmem [resolvable:$true] %s163
          %169 = dma.hbm_to_vmem [thread:$0]  %s162, 4096, %s164, %s148, 256, 64, 4
        $region24: #{tpu_custom_call.1} parent=19 // pred_fallthru
          _
      $region20: #{tpu_custom_call.1} parent=5 // pred_fallthru
        _
      %p170 = scmp.le.s32.totalorder 1, %s30
      %p171 = scmp.lt.s32.totalorder %s30, 5
      %p172 = pnand %p170, %p171
      %p173 = pneg %p172
      // Predicated region
      $region25: #{tpu_custom_call.1} parent=5 // pred_check
        _
      $region26: #{tpu_custom_call.1} parent=5 // pred_check_branch
        %175 = sbr.rel (%p172) target = $region28
      $region27: #{tpu_custom_call.1} parent=5 // pred_region
        %s176 = ssub.s32 %s30, 1
        %s177 = sand.u32 %s49, 1
        %s178 = scalar_lea.sflag [#allocation7], %s177
        %s179 = sand.u32 %s49, 1
        %s180 = smul.addr %s179, 256
        %s181 = scalar_lea.vmem [#allocation6], %s180
        // Predicated region
        $region29: #{tpu_custom_call.1} parent=27 // pred_check
          %p182 = pneg %p62
        $region30: #{tpu_custom_call.1} parent=27 // pred_check_branch
          %184 = sbr.rel (%p182) target = $region32
        $region31: #{tpu_custom_call.1} parent=27 // pred_region
          %186 = dma.done %s178, 4096
        $region32: #{tpu_custom_call.1} parent=27 // pred_fallthru
          _
        // Predicated region
        $region33: #{tpu_custom_call.1} parent=27 // pred_check
          %p187 = pneg %p83
        $region34: #{tpu_custom_call.1} parent=27 // pred_check_branch
          %189 = sbr.rel (%p187) target = $region36
        $region35: #{tpu_custom_call.1} parent=27 // pred_region
          %191 = dma.done [#allocation10], 4096
        $region36: #{tpu_custom_call.1} parent=27 // pred_fallthru
          _
        %s192 = sand.u32 %s49, 1
        %s193 = scalar_lea.sflag [#allocation7], %s192
        %s194 = sand.u32 %s49, 1
        %s195 = smul.addr %s194, 256
        %s196 = scalar_lea.vmem [#allocation6], %s195
        %p197 = pneg %p62
        %p198 = pneg %p59
        %p199 = pneg %p83
        %p200 = pneg %p80
        %p201 = pneg %p111
        %p202 = pneg %p108
        %s203 = sand.u32 %s98, 1
        %s204 = scalar_lea.sflag [#allocation8], %s203
        %s205 = sand.u32 %s98, 1
        %s206 = smul.addr %s205, 512
        %s207 = scalar_lea.vmem [#allocation11], %s206
        %s208 = sld [smem:[#allocation4 + %s35]]
        %s209 = sld [smem:[#allocation5 + %s35]]
        %s210 = smul.u32 64, %s208
        %s211 = sld [smem:[#allocation4 + %s35]]
        %s212 = smul.u32 64, %s211
        %s213 = sld [smem:[#allocation4 + %s35]]
        %s214 = ssub.s32 %s35, 1
        %p215 = scmp.gt.s32.totalorder %s214, 0
        %s216 = scalar_select %p215, %s214, 0
        %s217 = sld [smem:[#allocation4 + %s216]]
        %s218 = sadd.s32 %s35, 1
        %p219 = scmp.lt.s32.totalorder %s218, 3
        %s220 = scalar_select %p219, %s218, 3
        %s221 = sld [smem:[#allocation4 + %s220]]
        %p222 = scmp.eq.s32.totalorder %s35, 0
        %p223 = scmp.ne.s32.totalorder %s217, %s213
        %p224 = por %p222, %p223
        // Predicated region
        $region37: #{tpu_custom_call.1} parent=27 // pred_check
          %p225 = pneg %p224
        $region38: #{tpu_custom_call.1} parent=27 // pred_check_branch
          %227 = sbr.rel (%p225) target = $region40
        $region39: #{tpu_custom_call.1} parent=27 // pred_region
          %228 = vst [vmem:[#allocation2] sm:$0xff] 0.0
          %229 = vst [vmem:[#allocation2 + $0x8] sm:$0xff] 0.0
          %230 = vst [vmem:[#allocation2 + $0x10] sm:$0xff] 0.0
          %231 = vst [vmem:[#allocation2 + $0x18] sm:$0xff] 0.0
          %232 = vst [vmem:[#allocation2 + $0x20] sm:$0xff] 0.0
          %233 = vst [vmem:[#allocation2 + $0x28] sm:$0xff] 0.0
          %234 = vst [vmem:[#allocation2 + $0x30] sm:$0xff] 0.0
          %235 = vst [vmem:[#allocation2 + $0x38] sm:$0xff] 0.0
          %236 = vst [vmem:[#allocation2 + $0x40] sm:$0xff] 0.0
          %237 = vst [vmem:[#allocation2 + $0x48] sm:$0xff] 0.0
          %238 = vst [vmem:[#allocation2 + $0x50] sm:$0xff] 0.0
          %239 = vst [vmem:[#allocation2 + $0x58] sm:$0xff] 0.0
          %240 = vst [vmem:[#allocation2 + $0x60] sm:$0xff] 0.0
          %241 = vst [vmem:[#allocation2 + $0x68] sm:$0xff] 0.0
          %242 = vst [vmem:[#allocation2 + $0x70] sm:$0xff] 0.0
          %243 = vst [vmem:[#allocation2 + $0x78] sm:$0xff] 0.0
          %244 = vst [vmem:[#allocation2 + $0x80] sm:$0xff] 0.0
          %245 = vst [vmem:[#allocation2 + $0x88] sm:$0xff] 0.0
          %246 = vst [vmem:[#allocation2 + $0x90] sm:$0xff] 0.0
          %247 = vst [vmem:[#allocation2 + $0x98] sm:$0xff] 0.0
          %248 = vst [vmem:[#allocation2 + $0xa0] sm:$0xff] 0.0
          %249 = vst [vmem:[#allocation2 + $0xa8] sm:$0xff] 0.0
          %250 = vst [vmem:[#allocation2 + $0xb0] sm:$0xff] 0.0
          %251 = vst [vmem:[#allocation2 + $0xb8] sm:$0xff] 0.0
          %252 = vst [vmem:[#allocation2 + $0xc0] sm:$0xff] 0.0
          %253 = vst [vmem:[#allocation2 + $0xc8] sm:$0xff] 0.0
          %254 = vst [vmem:[#allocation2 + $0xd0] sm:$0xff] 0.0
          %255 = vst [vmem:[#allocation2 + $0xd8] sm:$0xff] 0.0
          %256 = vst [vmem:[#allocation2 + $0xe0] sm:$0xff] 0.0
          %257 = vst [vmem:[#allocation2 + $0xe8] sm:$0xff] 0.0
          %258 = vst [vmem:[#allocation2 + $0xf0] sm:$0xff] 0.0
          %259 = vst [vmem:[#allocation2 + $0xf8] sm:$0xff] 0.0
          %260 = vst [vmem:[#allocation2 + $0x100] sm:$0xff] 0.0
          %261 = vst [vmem:[#allocation2 + $0x108] sm:$0xff] 0.0
          %262 = vst [vmem:[#allocation2 + $0x110] sm:$0xff] 0.0
          %263 = vst [vmem:[#allocation2 + $0x118] sm:$0xff] 0.0
          %264 = vst [vmem:[#allocation2 + $0x120] sm:$0xff] 0.0
          %265 = vst [vmem:[#allocation2 + $0x128] sm:$0xff] 0.0
          %266 = vst [vmem:[#allocation2 + $0x130] sm:$0xff] 0.0
          %267 = vst [vmem:[#allocation2 + $0x138] sm:$0xff] 0.0
          %268 = vst [vmem:[#allocation2 + $0x140] sm:$0xff] 0.0
          %269 = vst [vmem:[#allocation2 + $0x148] sm:$0xff] 0.0
          %270 = vst [vmem:[#allocation2 + $0x150] sm:$0xff] 0.0
          %271 = vst [vmem:[#allocation2 + $0x158] sm:$0xff] 0.0
          %272 = vst [vmem:[#allocation2 + $0x160] sm:$0xff] 0.0
          %273 = vst [vmem:[#allocation2 + $0x168] sm:$0xff] 0.0
          %274 = vst [vmem:[#allocation2 + $0x170] sm:$0xff] 0.0
          %275 = vst [vmem:[#allocation2 + $0x178] sm:$0xff] 0.0
          %276 = vst [vmem:[#allocation2 + $0x180] sm:$0xff] 0.0
          %277 = vst [vmem:[#allocation2 + $0x188] sm:$0xff] 0.0
          %278 = vst [vmem:[#allocation2 + $0x190] sm:$0xff] 0.0
          %279 = vst [vmem:[#allocation2 + $0x198] sm:$0xff] 0.0
          %280 = vst [vmem:[#allocation2 + $0x1a0] sm:$0xff] 0.0
          %281 = vst [vmem:[#allocation2 + $0x1a8] sm:$0xff] 0.0
          %282 = vst [vmem:[#allocation2 + $0x1b0] sm:$0xff] 0.0
          %283 = vst [vmem:[#allocation2 + $0x1b8] sm:$0xff] 0.0
          %284 = vst [vmem:[#allocation2 + $0x1c0] sm:$0xff] 0.0
          %285 = vst [vmem:[#allocation2 + $0x1c8] sm:$0xff] 0.0
          %286 = vst [vmem:[#allocation2 + $0x1d0] sm:$0xff] 0.0
          %287 = vst [vmem:[#allocation2 + $0x1d8] sm:$0xff] 0.0
          %288 = vst [vmem:[#allocation2 + $0x1e0] sm:$0xff] 0.0
          %289 = vst [vmem:[#allocation2 + $0x1e8] sm:$0xff] 0.0
          %290 = vst [vmem:[#allocation2 + $0x1f0] sm:$0xff] 0.0
          %291 = vst [vmem:[#allocation2 + $0x1f8] sm:$0xff] 0.0
        $region40: #{tpu_custom_call.1} parent=27 // pred_fallthru
          _
        %s292 = sld [smem:[#allocation5 + %s35]]
        %s293 = smul.u32 %s292, 128
        %v294 = vld [vmem:[#allocation2] sm:$0xff]
        %v295 = vld [vmem:[#allocation2 + $0x8] sm:$0xff]
        %v296 = vld [vmem:[#allocation2 + $0x10] sm:$0xff]
        %v297 = vld [vmem:[#allocation2 + $0x18] sm:$0xff]
        %v298 = vld [vmem:[#allocation2 + $0x20] sm:$0xff]
        %v299 = vld [vmem:[#allocation2 + $0x28] sm:$0xff]
        %v300 = vld [vmem:[#allocation2 + $0x30] sm:$0xff]
        %v301 = vld [vmem:[#allocation2 + $0x38] sm:$0xff]
        %v302 = vld [vmem:[#allocation2 + $0x40] sm:$0xff]
        %v303 = vld [vmem:[#allocation2 + $0x48] sm:$0xff]
        %v304 = vld [vmem:[#allocation2 + $0x50] sm:$0xff]
        %v305 = vld [vmem:[#allocation2 + $0x58] sm:$0xff]
        %v306 = vld [vmem:[#allocation2 + $0x60] sm:$0xff]
        %v307 = vld [vmem:[#allocation2 + $0x68] sm:$0xff]
        %v308 = vld [vmem:[#allocation2 + $0x70] sm:$0xff]
        %v309 = vld [vmem:[#allocation2 + $0x78] sm:$0xff]
        %v310 = vld [vmem:[#allocation2 + $0x80] sm:$0xff]
        %v311 = vld [vmem:[#allocation2 + $0x88] sm:$0xff]
        %v312 = vld [vmem:[#allocation2 + $0x90] sm:$0xff]
        %v313 = vld [vmem:[#allocation2 + $0x98] sm:$0xff]
        %v314 = vld [vmem:[#allocation2 + $0xa0] sm:$0xff]
        %v315 = vld [vmem:[#allocation2 + $0xa8] sm:$0xff]
        %v316 = vld [vmem:[#allocation2 + $0xb0] sm:$0xff]
        %v317 = vld [vmem:[#allocation2 + $0xb8] sm:$0xff]
        %v318 = vld [vmem:[#allocation2 + $0xc0] sm:$0xff]
        %v319 = vld [vmem:[#allocation2 + $0xc8] sm:$0xff]
        %v320 = vld [vmem:[#allocation2 + $0xd0] sm:$0xff]
        %v321 = vld [vmem:[#allocation2 + $0xd8] sm:$0xff]
        %v322 = vld [vmem:[#allocation2 + $0xe0] sm:$0xff]
        %v323 = vld [vmem:[#allocation2 + $0xe8] sm:$0xff]
        %v324 = vld [vmem:[#allocation2 + $0xf0] sm:$0xff]
        %v325 = vld [vmem:[#allocation2 + $0xf8] sm:$0xff]
        %v326 = vld [vmem:[#allocation2 + $0x100] sm:$0xff]
        %v327 = vld [vmem:[#allocation2 + $0x108] sm:$0xff]
        %v328 = vld [vmem:[#allocation2 + $0x110] sm:$0xff]
        %v329 = vld [vmem:[#allocation2 + $0x118] sm:$0xff]
        %v330 = vld [vmem:[#allocation2 + $0x120] sm:$0xff]
        %v331 = vld [vmem:[#allocation2 + $0x128] sm:$0xff]
        %v332 = vld [vmem:[#allocation2 + $0x130] sm:$0xff]
        %v333 = vld [vmem:[#allocation2 + $0x138] sm:$0xff]
        %v334 = vld [vmem:[#allocation2 + $0x140] sm:$0xff]
        %v335 = vld [vmem:[#allocation2 + $0x148] sm:$0xff]
        %v336 = vld [vmem:[#allocation2 + $0x150] sm:$0xff]
        %v337 = vld [vmem:[#allocation2 + $0x158] sm:$0xff]
        %v338 = vld [vmem:[#allocation2 + $0x160] sm:$0xff]
        %v339 = vld [vmem:[#allocation2 + $0x168] sm:$0xff]
        %v340 = vld [vmem:[#allocation2 + $0x170] sm:$0xff]
        %v341 = vld [vmem:[#allocation2 + $0x178] sm:$0xff]
        %v342 = vld [vmem:[#allocation2 + $0x180] sm:$0xff]
        %v343 = vld [vmem:[#allocation2 + $0x188] sm:$0xff]
        %v344 = vld [vmem:[#allocation2 + $0x190] sm:$0xff]
        %v345 = vld [vmem:[#allocation2 + $0x198] sm:$0xff]
        %v346 = vld [vmem:[#allocation2 + $0x1a0] sm:$0xff]
        %v347 = vld [vmem:[#allocation2 + $0x1a8] sm:$0xff]
        %v348 = vld [vmem:[#allocation2 + $0x1b0] sm:$0xff]
        %v349 = vld [vmem:[#allocation2 + $0x1b8] sm:$0xff]
        %v350 = vld [vmem:[#allocation2 + $0x1c0] sm:$0xff]
        %v351 = vld [vmem:[#allocation2 + $0x1c8] sm:$0xff]
        %v352 = vld [vmem:[#allocation2 + $0x1d0] sm:$0xff]
        %v353 = vld [vmem:[#allocation2 + $0x1d8] sm:$0xff]
        %v354 = vld [vmem:[#allocation2 + $0x1e0] sm:$0xff]
        %v355 = vld [vmem:[#allocation2 + $0x1e8] sm:$0xff]
        %v356 = vld [vmem:[#allocation2 + $0x1f0] sm:$0xff]
        %v357 = vld [vmem:[#allocation2 + $0x1f8] sm:$0xff]
        %v358 = vld [vmem:[%s181] sm:$0xf]
        %v359 = vld [vmem:[%s181 + $0x4] sm:$0xf]
        %v360 = vld [vmem:[%s181 + $0x8] sm:$0xf]
        %v361 = vld [vmem:[%s181 + $0xc] sm:$0xf]
        %v362 = vld [vmem:[%s181 + $0x10] sm:$0xf]
        %v363 = vld [vmem:[%s181 + $0x14] sm:$0xf]
        %v364 = vld [vmem:[%s181 + $0x18] sm:$0xf]
        %v365 = vld [vmem:[%s181 + $0x1c] sm:$0xf]
        %v366 = vld [vmem:[%s181 + $0x20] sm:$0xf]
        %v367 = vld [vmem:[%s181 + $0x24] sm:$0xf]
        %v368 = vld [vmem:[%s181 + $0x28] sm:$0xf]
        %v369 = vld [vmem:[%s181 + $0x2c] sm:$0xf]
        %v370 = vld [vmem:[%s181 + $0x30] sm:$0xf]
        %v371 = vld [vmem:[%s181 + $0x34] sm:$0xf]
        %v372 = vld [vmem:[%s181 + $0x38] sm:$0xf]
        %v373 = vld [vmem:[%s181 + $0x3c] sm:$0xf]
        %v374 = vld [vmem:[%s181 + $0x40] sm:$0xf]
        %v375 = vld [vmem:[%s181 + $0x44] sm:$0xf]
        %v376 = vld [vmem:[%s181 + $0x48] sm:$0xf]
        %v377 = vld [vmem:[%s181 + $0x4c] sm:$0xf]
        %v378 = vld [vmem:[%s181 + $0x50] sm:$0xf]
        %v379 = vld [vmem:[%s181 + $0x54] sm:$0xf]
        %v380 = vld [vmem:[%s181 + $0x58] sm:$0xf]
        %v381 = vld [vmem:[%s181 + $0x5c] sm:$0xf]
        %v382 = vld [vmem:[%s181 + $0x60] sm:$0xf]
        %v383 = vld [vmem:[%s181 + $0x64] sm:$0xf]
        %v384 = vld [vmem:[%s181 + $0x68] sm:$0xf]
        %v385 = vld [vmem:[%s181 + $0x6c] sm:$0xf]
        %v386 = vld [vmem:[%s181 + $0x70] sm:$0xf]
        %v387 = vld [vmem:[%s181 + $0x74] sm:$0xf]
        %v388 = vld [vmem:[%s181 + $0x78] sm:$0xf]
        %v389 = vld [vmem:[%s181 + $0x7c] sm:$0xf]
        %v390 = vld [vmem:[%s181 + $0x80] sm:$0xf]
        %v391 = vld [vmem:[%s181 + $0x84] sm:$0xf]
        %v392 = vld [vmem:[%s181 + $0x88] sm:$0xf]
        %v393 = vld [vmem:[%s181 + $0x8c] sm:$0xf]
        %v394 = vld [vmem:[%s181 + $0x90] sm:$0xf]
        %v395 = vld [vmem:[%s181 + $0x94] sm:$0xf]
        %v396 = vld [vmem:[%s181 + $0x98] sm:$0xf]
        %v397 = vld [vmem:[%s181 + $0x9c] sm:$0xf]
        %v398 = vld [vmem:[%s181 + $0xa0] sm:$0xf]
        %v399 = vld [vmem:[%s181 + $0xa4] sm:$0xf]
        %v400 = vld [vmem:[%s181 + $0xa8] sm:$0xf]
        %v401 = vld [vmem:[%s181 + $0xac] sm:$0xf]
        %v402 = vld [vmem:[%s181 + $0xb0] sm:$0xf]
        %v403 = vld [vmem:[%s181 + $0xb4] sm:$0xf]
        %v404 = vld [vmem:[%s181 + $0xb8] sm:$0xf]
        %v405 = vld [vmem:[%s181 + $0xbc] sm:$0xf]
        %v406 = vld [vmem:[%s181 + $0xc0] sm:$0xf]
        %v407 = vld [vmem:[%s181 + $0xc4] sm:$0xf]
        %v408 = vld [vmem:[%s181 + $0xc8] sm:$0xf]
        %v409 = vld [vmem:[%s181 + $0xcc] sm:$0xf]
        %v410 = vld [vmem:[%s181 + $0xd0] sm:$0xf]
        %v411 = vld [vmem:[%s181 + $0xd4] sm:$0xf]
        %v412 = vld [vmem:[%s181 + $0xd8] sm:$0xf]
        %v413 = vld [vmem:[%s181 + $0xdc] sm:$0xf]
        %v414 = vld [vmem:[%s181 + $0xe0] sm:$0xf]
        %v415 = vld [vmem:[%s181 + $0xe4] sm:$0xf]
        %v416 = vld [vmem:[%s181 + $0xe8] sm:$0xf]
        %v417 = vld [vmem:[%s181 + $0xec] sm:$0xf]
        %v418 = vld [vmem:[%s181 + $0xf0] sm:$0xf]
        %v419 = vld [vmem:[%s181 + $0xf4] sm:$0xf]
        %v420 = vld [vmem:[%s181 + $0xf8] sm:$0xf]
        %v421 = vld [vmem:[%s181 + $0xfc] sm:$0xf]
        %s422 = sshra.s32 %s293, 3
        %s423 = sand.u32 %s293, 7
        %s424 = smul.addr %s422, 4
        %s425 = scalar_lea.vmem [#allocation9], %s424
        %v426 = vld [vmem:[%s425] sm:$0xf]
        %v427 = vld [vmem:[%s425 + $0x4] sm:$0xf]
        %v428 = vld [vmem:[%s425 + $0x8] sm:$0xf]
        %v429 = vld [vmem:[%s425 + $0xc] sm:$0xf]
        %v430 = vld [vmem:[%s425 + $0x10] sm:$0xf]
        %v431 = vld [vmem:[%s425 + $0x14] sm:$0xf]
        %v432 = vld [vmem:[%s425 + $0x18] sm:$0xf]
        %v433 = vld [vmem:[%s425 + $0x1c] sm:$0xf]
        %v434 = vld [vmem:[%s425 + $0x20] sm:$0xf]
        %v435 = vld [vmem:[%s425 + $0x24] sm:$0xf]
        %v436 = vld [vmem:[%s425 + $0x28] sm:$0xf]
        %v437 = vld [vmem:[%s425 + $0x2c] sm:$0xf]
        %v438 = vld [vmem:[%s425 + $0x30] sm:$0xf]
        %v439 = vld [vmem:[%s425 + $0x34] sm:$0xf]
        %v440 = vld [vmem:[%s425 + $0x38] sm:$0xf]
        %v441 = vld [vmem:[%s425 + $0x3c] sm:$0xf]
        %v506 = vunpack.c.l.b16 %v358
        %v507 = vunpack.c.l.b16 %v359
        %v508 = vunpack.c.l.b16 %v360
        %v509 = vunpack.c.l.b16 %v361
        %v510 = vunpack.c.l.b16 %v362
        %v511 = vunpack.c.l.b16 %v363
        %v512 = vunpack.c.l.b16 %v364
        %v513 = vunpack.c.l.b16 %v365
        %v514 = vunpack.c.l.b16 %v366
        %v515 = vunpack.c.l.b16 %v367
        %v516 = vunpack.c.l.b16 %v368
        %v517 = vunpack.c.l.b16 %v369
        %v518 = vunpack.c.l.b16 %v370
        %v519 = vunpack.c.l.b16 %v371
        %v520 = vunpack.c.l.b16 %v372
        %v521 = vunpack.c.l.b16 %v373
        %v522 = vunpack.c.l.b16 %v374
        %v523 = vunpack.c.l.b16 %v375
        %v524 = vunpack.c.l.b16 %v376
        %v525 = vunpack.c.l.b16 %v377
        %v526 = vunpack.c.l.b16 %v378
        %v527 = vunpack.c.l.b16 %v379
        %v528 = vunpack.c.l.b16 %v380
        %v529 = vunpack.c.l.b16 %v381
        %v530 = vunpack.c.l.b16 %v382
        %v531 = vunpack.c.l.b16 %v383
        %v532 = vunpack.c.l.b16 %v384
        %v533 = vunpack.c.l.b16 %v385
        %v534 = vunpack.c.l.b16 %v386
        %v535 = vunpack.c.l.b16 %v387
        %v536 = vunpack.c.l.b16 %v388
        %v537 = vunpack.c.l.b16 %v389
        %v538 = vunpack.c.l.b16 %v390
        %v539 = vunpack.c.l.b16 %v391
        %v540 = vunpack.c.l.b16 %v392
        %v541 = vunpack.c.l.b16 %v393
        %v542 = vunpack.c.l.b16 %v394
        %v543 = vunpack.c.l.b16 %v395
        %v544 = vunpack.c.l.b16 %v396
        %v545 = vunpack.c.l.b16 %v397
        %v546 = vunpack.c.l.b16 %v398
        %v547 = vunpack.c.l.b16 %v399
        %v548 = vunpack.c.l.b16 %v400
        %v549 = vunpack.c.l.b16 %v401
        %v550 = vunpack.c.l.b16 %v402
        %v551 = vunpack.c.l.b16 %v403
        %v552 = vunpack.c.l.b16 %v404
        %v553 = vunpack.c.l.b16 %v405
        %v554 = vunpack.c.l.b16 %v406
        %v555 = vunpack.c.l.b16 %v407
        %v556 = vunpack.c.l.b16 %v408
        %v557 = vunpack.c.l.b16 %v409
        %v558 = vunpack.c.l.b16 %v410
        %v559 = vunpack.c.l.b16 %v411
        %v560 = vunpack.c.l.b16 %v412
        %v561 = vunpack.c.l.b16 %v413
        %v562 = vunpack.c.l.b16 %v414
        %v563 = vunpack.c.l.b16 %v415
        %v564 = vunpack.c.l.b16 %v416
        %v565 = vunpack.c.l.b16 %v417
        %v566 = vunpack.c.l.b16 %v418
        %v567 = vunpack.c.l.b16 %v419
        %v568 = vunpack.c.l.b16 %v420
        %v569 = vunpack.c.l.b16 %v421
        %v570 = vpack.c.b16 %v507, %v506
        %v571 = vpack.c.b16 %v509, %v508
        %v572 = vpack.c.b16 %v511, %v510
        %v573 = vpack.c.b16 %v513, %v512
        %v574 = vpack.c.b16 %v515, %v514
        %v575 = vpack.c.b16 %v517, %v516
        %v576 = vpack.c.b16 %v519, %v518
        %v577 = vpack.c.b16 %v521, %v520
        %v578 = vpack.c.b16 %v523, %v522
        %v579 = vpack.c.b16 %v525, %v524
        %v580 = vpack.c.b16 %v527, %v526
        %v581 = vpack.c.b16 %v529, %v528
        %v582 = vpack.c.b16 %v531, %v530
        %v583 = vpack.c.b16 %v533, %v532
        %v584 = vpack.c.b16 %v535, %v534
        %v585 = vpack.c.b16 %v537, %v536
        %v586 = vpack.c.b16 %v539, %v538
        %v587 = vpack.c.b16 %v541, %v540
        %v588 = vpack.c.b16 %v543, %v542
        %v589 = vpack.c.b16 %v545, %v544
        %v590 = vpack.c.b16 %v547, %v546
        %v591 = vpack.c.b16 %v549, %v548
        %v592 = vpack.c.b16 %v551, %v550
        %v593 = vpack.c.b16 %v553, %v552
        %v594 = vpack.c.b16 %v555, %v554
        %v595 = vpack.c.b16 %v557, %v556
        %v596 = vpack.c.b16 %v559, %v558
        %v597 = vpack.c.b16 %v561, %v560
        %v598 = vpack.c.b16 %v563, %v562
        %v599 = vpack.c.b16 %v565, %v564
        %v600 = vpack.c.b16 %v567, %v566
        %v601 = vpack.c.b16 %v569, %v568
        %v650 = vunpack.c.l.b16 %v426
        %v651 = vunpack.c.l.b16 %v427
        %v652 = vunpack.c.l.b16 %v428
        %v653 = vunpack.c.l.b16 %v429
        %v654 = vunpack.c.l.b16 %v430
        %v655 = vunpack.c.l.b16 %v431
        %v656 = vunpack.c.l.b16 %v432
        %v657 = vunpack.c.l.b16 %v433
        %v658 = vunpack.c.l.b16 %v434
        %v659 = vunpack.c.l.b16 %v435
        %v660 = vunpack.c.l.b16 %v436
        %v661 = vunpack.c.l.b16 %v437
        %v662 = vunpack.c.l.b16 %v438
        %v663 = vunpack.c.l.b16 %v439
        %v664 = vunpack.c.l.b16 %v440
        %v665 = vunpack.c.l.b16 %v441
        %v666 = vpack.c.b16 %v651, %v650
        %v667 = vpack.c.b16 %v653, %v652
        %v668 = vpack.c.b16 %v655, %v654
        %v669 = vpack.c.b16 %v657, %v656
        %v670 = vpack.c.b16 %v659, %v658
        %v671 = vpack.c.b16 %v661, %v660
        %v672 = vpack.c.b16 %v663, %v662
        %v673 = vpack.c.b16 %v665, %v664
        %682 = vmatpush.bf16.msra.mxu0 %v673
        %683 = vmatpush.bf16.msra.mxu0 %v672
        %684 = vmatpush.bf16.msra.mxu0 %v671
        %685 = vmatpush.bf16.msra.mxu0 %v670
        %686 = vmatpush.bf16.msra.mxu0 %v669
        %687 = vmatpush.bf16.msra.mxu0 %v668
        %688 = vmatpush.bf16.msra.mxu0 %v667
        %689 = vmatpush.bf16.msra.mxu0 %v666
        %690 = vmatmul.bf16.gmra.mxu0 %v570
        %v691 = vpop.f32.mrf.mxu0
        %v692 = vadd.f32 0.0, %v691
        %v693 = vpop.f32.mrf.mxu0
        %v694 = vadd.f32 0.0, %v693
        %695 = vmatmul.bf16.gmra.mxu0 %v571
        %v696 = vpop.f32.mrf.mxu0
        %v697 = vadd.f32 0.0, %v696
        %v698 = vpop.f32.mrf.mxu0
        %v699 = vadd.f32 0.0, %v698
        %700 = vmatmul.bf16.gmra.mxu0 %v572
        %v701 = vpop.f32.mrf.mxu0
        %v702 = vadd.f32 0.0, %v701
        %v703 = vpop.f32.mrf.mxu0
        %v704 = vadd.f32 0.0, %v703
        %705 = vmatmul.bf16.gmra.mxu0 %v573
        %v706 = vpop.f32.mrf.mxu0
        %v707 = vadd.f32 0.0, %v706
        %v708 = vpop.f32.mrf.mxu0
        %v709 = vadd.f32 0.0, %v708
        %710 = vmatmul.bf16.gmra.mxu0 %v574
        %v711 = vpop.f32.mrf.mxu0
        %v712 = vadd.f32 0.0, %v711
        %v713 = vpop.f32.mrf.mxu0
        %v714 = vadd.f32 0.0, %v713
        %715 = vmatmul.bf16.gmra.mxu0 %v575
        %v716 = vpop.f32.mrf.mxu0
        %v717 = vadd.f32 0.0, %v716
        %v718 = vpop.f32.mrf.mxu0
        %v719 = vadd.f32 0.0, %v718
        %720 = vmatmul.bf16.gmra.mxu0 %v576
        %v721 = vpop.f32.mrf.mxu0
        %v722 = vadd.f32 0.0, %v721
        %v723 = vpop.f32.mrf.mxu0
        %v724 = vadd.f32 0.0, %v723
        %725 = vmatmul.bf16.gmra.mxu0 %v577
        %v726 = vpop.f32.mrf.mxu0
        %v727 = vadd.f32 0.0, %v726
        %v728 = vpop.f32.mrf.mxu0
        %v729 = vadd.f32 0.0, %v728
        %730 = vmatmul.bf16.gmra.mxu0 %v578
        %v731 = vpop.f32.mrf.mxu0
        %v732 = vadd.f32 0.0, %v731
        %v733 = vpop.f32.mrf.mxu0
        %v734 = vadd.f32 0.0, %v733
        %735 = vmatmul.bf16.gmra.mxu0 %v579
        %v736 = vpop.f32.mrf.mxu0
        %v737 = vadd.f32 0.0, %v736
        %v738 = vpop.f32.mrf.mxu0
        %v739 = vadd.f32 0.0, %v738
        %740 = vmatmul.bf16.gmra.mxu0 %v580
        %v741 = vpop.f32.mrf.mxu0
        %v742 = vadd.f32 0.0, %v741
        %v743 = vpop.f32.mrf.mxu0
        %v744 = vadd.f32 0.0, %v743
        %745 = vmatmul.bf16.gmra.mxu0 %v581
        %v746 = vpop.f32.mrf.mxu0
        %v747 = vadd.f32 0.0, %v746
        %v748 = vpop.f32.mrf.mxu0
        %v749 = vadd.f32 0.0, %v748
        %750 = vmatmul.bf16.gmra.mxu0 %v582
        %v751 = vpop.f32.mrf.mxu0
        %v752 = vadd.f32 0.0, %v751
        %v753 = vpop.f32.mrf.mxu0
        %v754 = vadd.f32 0.0, %v753
        %755 = vmatmul.bf16.gmra.mxu0 %v583
        %v756 = vpop.f32.mrf.mxu0
        %v757 = vadd.f32 0.0, %v756
        %v758 = vpop.f32.mrf.mxu0
        %v759 = vadd.f32 0.0, %v758
        %760 = vmatmul.bf16.gmra.mxu0 %v584
        %v761 = vpop.f32.mrf.mxu0
        %v762 = vadd.f32 0.0, %v761
        %v763 = vpop.f32.mrf.mxu0
        %v764 = vadd.f32 0.0, %v763
        %765 = vmatmul.bf16.gmra.mxu0 %v585
        %v766 = vpop.f32.mrf.mxu0
        %v767 = vadd.f32 0.0, %v766
        %v768 = vpop.f32.mrf.mxu0
        %v769 = vadd.f32 0.0, %v768
        %770 = vmatmul.bf16.gmra.mxu0 %v586
        %v771 = vpop.f32.mrf.mxu0
        %v772 = vadd.f32 0.0, %v771
        %v773 = vpop.f32.mrf.mxu0
        %v774 = vadd.f32 0.0, %v773
        %775 = vmatmul.bf16.gmra.mxu0 %v587
        %v776 = vpop.f32.mrf.mxu0
        %v777 = vadd.f32 0.0, %v776
        %v778 = vpop.f32.mrf.mxu0
        %v779 = vadd.f32 0.0, %v778
        %780 = vmatmul.bf16.gmra.mxu0 %v588
        %v781 = vpop.f32.mrf.mxu0
        %v782 = vadd.f32 0.0, %v781
        %v783 = vpop.f32.mrf.mxu0
        %v784 = vadd.f32 0.0, %v783
        %785 = vmatmul.bf16.gmra.mxu0 %v589
        %v786 = vpop.f32.mrf.mxu0
        %v787 = vadd.f32 0.0, %v786
        %v788 = vpop.f32.mrf.mxu0
        %v789 = vadd.f32 0.0, %v788
        %790 = vmatmul.bf16.gmra.mxu0 %v590
        %v791 = vpop.f32.mrf.mxu0
        %v792 = vadd.f32 0.0, %v791
        %v793 = vpop.f32.mrf.mxu0
        %v794 = vadd.f32 0.0, %v793
        %795 = vmatmul.bf16.gmra.mxu0 %v591
        %v796 = vpop.f32.mrf.mxu0
        %v797 = vadd.f32 0.0, %v796
        %v798 = vpop.f32.mrf.mxu0
        %v799 = vadd.f32 0.0, %v798
        %800 = vmatmul.bf16.gmra.mxu0 %v592
        %v801 = vpop.f32.mrf.mxu0
        %v802 = vadd.f32 0.0, %v801
        %v803 = vpop.f32.mrf.mxu0
        %v804 = vadd.f32 0.0, %v803
        %805 = vmatmul.bf16.gmra.mxu0 %v593
        %v806 = vpop.f32.mrf.mxu0
        %v807 = vadd.f32 0.0, %v806
        %v808 = vpop.f32.mrf.mxu0
        %v809 = vadd.f32 0.0, %v808
        %810 = vmatmul.bf16.gmra.mxu0 %v594
        %v811 = vpop.f32.mrf.mxu0
        %v812 = vadd.f32 0.0, %v811
        %v813 = vpop.f32.mrf.mxu0
        %v814 = vadd.f32 0.0, %v813
        %815 = vmatmul.bf16.gmra.mxu0 %v595
        %v816 = vpop.f32.mrf.mxu0
        %v817 = vadd.f32 0.0, %v816
        %v818 = vpop.f32.mrf.mxu0
        %v819 = vadd.f32 0.0, %v818
        %820 = vmatmul.bf16.gmra.mxu0 %v596
        %v821 = vpop.f32.mrf.mxu0
        %v822 = vadd.f32 0.0, %v821
        %v823 = vpop.f32.mrf.mxu0
        %v824 = vadd.f32 0.0, %v823
        %825 = vmatmul.bf16.gmra.mxu0 %v597
        %v826 = vpop.f32.mrf.mxu0
        %v827 = vadd.f32 0.0, %v826
        %v828 = vpop.f32.mrf.mxu0
        %v829 = vadd.f32 0.0, %v828
        %830 = vmatmul.bf16.gmra.mxu0 %v598
        %v831 = vpop.f32.mrf.mxu0
        %v832 = vadd.f32 0.0, %v831
        %v833 = vpop.f32.mrf.mxu0
        %v834 = vadd.f32 0.0, %v833
        %835 = vmatmul.bf16.gmra.mxu0 %v599
        %v836 = vpop.f32.mrf.mxu0
        %v837 = vadd.f32 0.0, %v836
        %v838 = vpop.f32.mrf.mxu0
        %v839 = vadd.f32 0.0, %v838
        %840 = vmatmul.bf16.gmra.mxu0 %v600
        %v841 = vpop.f32.mrf.mxu0
        %v842 = vadd.f32 0.0, %v841
        %v843 = vpop.f32.mrf.mxu0
        %v844 = vadd.f32 0.0, %v843
        %845 = vmatmul.bf16.gmra.mxu0 %v601
        %v846 = vpop.f32.mrf.mxu0
        %v847 = vadd.f32 0.0, %v846
        %v848 = vpop.f32.mrf.mxu0
        %v849 = vadd.f32 0.0, %v848
        %850 = vdwg.mxu0
        %v851 = vadd.f32 %v294, %v692
        %v852 = vadd.f32 %v295, %v694
        %v853 = vadd.f32 %v296, %v697
        %v854 = vadd.f32 %v297, %v699
        %v855 = vadd.f32 %v298, %v702
        %v856 = vadd.f32 %v299, %v704
        %v857 = vadd.f32 %v300, %v707
        %v858 = vadd.f32 %v301, %v709
        %v859 = vadd.f32 %v302, %v712
        %v860 = vadd.f32 %v303, %v714
        %v861 = vadd.f32 %v304, %v717
        %v862 = vadd.f32 %v305, %v719
        %v863 = vadd.f32 %v306, %v722
        %v864 = vadd.f32 %v307, %v724
        %v865 = vadd.f32 %v308, %v727
        %v866 = vadd.f32 %v309, %v729
        %v867 = vadd.f32 %v310, %v732
        %v868 = vadd.f32 %v311, %v734
        %v869 = vadd.f32 %v312, %v737
        %v870 = vadd.f32 %v313, %v739
        %v871 = vadd.f32 %v314, %v742
        %v872 = vadd.f32 %v315, %v744
        %v873 = vadd.f32 %v316, %v747
        %v874 = vadd.f32 %v317, %v749
        %v875 = vadd.f32 %v318, %v752
        %v876 = vadd.f32 %v319, %v754
        %v877 = vadd.f32 %v320, %v757
        %v878 = vadd.f32 %v321, %v759
        %v879 = vadd.f32 %v322, %v762
        %v880 = vadd.f32 %v323, %v764
        %v881 = vadd.f32 %v324, %v767
        %v882 = vadd.f32 %v325, %v769
        %v883 = vadd.f32 %v326, %v772
        %v884 = vadd.f32 %v327, %v774
        %v885 = vadd.f32 %v328, %v777
        %v886 = vadd.f32 %v329, %v779
        %v887 = vadd.f32 %v330, %v782
        %v888 = vadd.f32 %v331, %v784
        %v889 = vadd.f32 %v332, %v787
        %v890 = vadd.f32 %v333, %v789
        %v891 = vadd.f32 %v334, %v792
        %v892 = vadd.f32 %v335, %v794
        %v893 = vadd.f32 %v336, %v797
        %v894 = vadd.f32 %v337, %v799
        %v895 = vadd.f32 %v338, %v802
        %v896 = vadd.f32 %v339, %v804
        %v897 = vadd.f32 %v340, %v807
        %v898 = vadd.f32 %v341, %v809
        %v899 = vadd.f32 %v342, %v812
        %v900 = vadd.f32 %v343, %v814
        %v901 = vadd.f32 %v344, %v817
        %v902 = vadd.f32 %v345, %v819
        %v903 = vadd.f32 %v346, %v822
        %v904 = vadd.f32 %v347, %v824
        %v905 = vadd.f32 %v348, %v827
        %v906 = vadd.f32 %v349, %v829
        %v907 = vadd.f32 %v350, %v832
        %v908 = vadd.f32 %v351, %v834
        %v909 = vadd.f32 %v352, %v837
        %v910 = vadd.f32 %v353, %v839
        %v911 = vadd.f32 %v354, %v842
        %v912 = vadd.f32 %v355, %v844
        %v913 = vadd.f32 %v356, %v847
        %v914 = vadd.f32 %v357, %v849
        %915 = vst [vmem:[#allocation2] sm:$0xff] %v851
        %916 = vst [vmem:[#allocation2 + $0x8] sm:$0xff] %v852
        %917 = vst [vmem:[#allocation2 + $0x10] sm:$0xff] %v853
        %918 = vst [vmem:[#allocation2 + $0x18] sm:$0xff] %v854
        %919 = vst [vmem:[#allocation2 + $0x20] sm:$0xff] %v855
        %920 = vst [vmem:[#allocation2 + $0x28] sm:$0xff] %v856
        %921 = vst [vmem:[#allocation2 + $0x30] sm:$0xff] %v857
        %922 = vst [vmem:[#allocation2 + $0x38] sm:$0xff] %v858
        %923 = vst [vmem:[#allocation2 + $0x40] sm:$0xff] %v859
        %924 = vst [vmem:[#allocation2 + $0x48] sm:$0xff] %v860
        %925 = vst [vmem:[#allocation2 + $0x50] sm:$0xff] %v861
        %926 = vst [vmem:[#allocation2 + $0x58] sm:$0xff] %v862
        %927 = vst [vmem:[#allocation2 + $0x60] sm:$0xff] %v863
        %928 = vst [vmem:[#allocation2 + $0x68] sm:$0xff] %v864
        %929 = vst [vmem:[#allocation2 + $0x70] sm:$0xff] %v865
        %930 = vst [vmem:[#allocation2 + $0x78] sm:$0xff] %v866
        %931 = vst [vmem:[#allocation2 + $0x80] sm:$0xff] %v867
        %932 = vst [vmem:[#allocation2 + $0x88] sm:$0xff] %v868
        %933 = vst [vmem:[#allocation2 + $0x90] sm:$0xff] %v869
        %934 = vst [vmem:[#allocation2 + $0x98] sm:$0xff] %v870
        %935 = vst [vmem:[#allocation2 + $0xa0] sm:$0xff] %v871
        %936 = vst [vmem:[#allocation2 + $0xa8] sm:$0xff] %v872
        %937 = vst [vmem:[#allocation2 + $0xb0] sm:$0xff] %v873
        %938 = vst [vmem:[#allocation2 + $0xb8] sm:$0xff] %v874
        %939 = vst [vmem:[#allocation2 + $0xc0] sm:$0xff] %v875
        %940 = vst [vmem:[#allocation2 + $0xc8] sm:$0xff] %v876
        %941 = vst [vmem:[#allocation2 + $0xd0] sm:$0xff] %v877
        %942 = vst [vmem:[#allocation2 + $0xd8] sm:$0xff] %v878
        %943 = vst [vmem:[#allocation2 + $0xe0] sm:$0xff] %v879
        %944 = vst [vmem:[#allocation2 + $0xe8] sm:$0xff] %v880
        %945 = vst [vmem:[#allocation2 + $0xf0] sm:$0xff] %v881
        %946 = vst [vmem:[#allocation2 + $0xf8] sm:$0xff] %v882
        %947 = vst [vmem:[#allocation2 + $0x100] sm:$0xff] %v883
        %948 = vst [vmem:[#allocation2 + $0x108] sm:$0xff] %v884
        %949 = vst [vmem:[#allocation2 + $0x110] sm:$0xff] %v885
        %950 = vst [vmem:[#allocation2 + $0x118] sm:$0xff] %v886
        %951 = vst [vmem:[#allocation2 + $0x120] sm:$0xff] %v887
        %952 = vst [vmem:[#allocation2 + $0x128] sm:$0xff] %v888
        %953 = vst [vmem:[#allocation2 + $0x130] sm:$0xff] %v889
        %954 = vst [vmem:[#allocation2 + $0x138] sm:$0xff] %v890
        %955 = vst [vmem:[#allocation2 + $0x140] sm:$0xff] %v891
        %956 = vst [vmem:[#allocation2 + $0x148] sm:$0xff] %v892
        %957 = vst [vmem:[#allocation2 + $0x150] sm:$0xff] %v893
        %958 = vst [vmem:[#allocation2 + $0x158] sm:$0xff] %v894
        %959 = vst [vmem:[#allocation2 + $0x160] sm:$0xff] %v895
        %960 = vst [vmem:[#allocation2 + $0x168] sm:$0xff] %v896
        %961 = vst [vmem:[#allocation2 + $0x170] sm:$0xff] %v897
        %962 = vst [vmem:[#allocation2 + $0x178] sm:$0xff] %v898
        %963 = vst [vmem:[#allocation2 + $0x180] sm:$0xff] %v899
        %964 = vst [vmem:[#allocation2 + $0x188] sm:$0xff] %v900
        %965 = vst [vmem:[#allocation2 + $0x190] sm:$0xff] %v901
        %966 = vst [vmem:[#allocation2 + $0x198] sm:$0xff] %v902
        %967 = vst [vmem:[#allocation2 + $0x1a0] sm:$0xff] %v903
        %968 = vst [vmem:[#allocation2 + $0x1a8] sm:$0xff] %v904
        %969 = vst [vmem:[#allocation2 + $0x1b0] sm:$0xff] %v905
        %970 = vst [vmem:[#allocation2 + $0x1b8] sm:$0xff] %v906
        %971 = vst [vmem:[#allocation2 + $0x1c0] sm:$0xff] %v907
        %972 = vst [vmem:[#allocation2 + $0x1c8] sm:$0xff] %v908
        %973 = vst [vmem:[#allocation2 + $0x1d0] sm:$0xff] %v909
        %974 = vst [vmem:[#allocation2 + $0x1d8] sm:$0xff] %v910
        %975 = vst [vmem:[#allocation2 + $0x1e0] sm:$0xff] %v911
        %976 = vst [vmem:[#allocation2 + $0x1e8] sm:$0xff] %v912
        %977 = vst [vmem:[#allocation2 + $0x1f0] sm:$0xff] %v913
        %978 = vst [vmem:[#allocation2 + $0x1f8] sm:$0xff] %v914
        %p979 = scmp.eq.s32.totalorder %s35, 3
        %p980 = scmp.ne.s32.totalorder %s221, %s213
        %p981 = por %p979, %p980
        // Predicated region
        $region41: #{tpu_custom_call.1} parent=27 // pred_check
          %p982 = pneg %p981
        $region42: #{tpu_custom_call.1} parent=27 // pred_check_branch
          %984 = sbr.rel (%p982) target = $region44
        $region43: #{tpu_custom_call.1} parent=27 // pred_region
          %v985 = vld [vmem:[#allocation2] sm:$0xff]
          %v986 = vld [vmem:[#allocation2 + $0x8] sm:$0xff]
          %v987 = vld [vmem:[#allocation2 + $0x10] sm:$0xff]
          %v988 = vld [vmem:[#allocation2 + $0x18] sm:$0xff]
          %v989 = vld [vmem:[#allocation2 + $0x20] sm:$0xff]
          %v990 = vld [vmem:[#allocation2 + $0x28] sm:$0xff]
          %v991 = vld [vmem:[#allocation2 + $0x30] sm:$0xff]
          %v992 = vld [vmem:[#allocation2 + $0x38] sm:$0xff]
          %v993 = vld [vmem:[#allocation2 + $0x40] sm:$0xff]
          %v994 = vld [vmem:[#allocation2 + $0x48] sm:$0xff]
          %v995 = vld [vmem:[#allocation2 + $0x50] sm:$0xff]
          %v996 = vld [vmem:[#allocation2 + $0x58] sm:$0xff]
          %v997 = vld [vmem:[#allocation2 + $0x60] sm:$0xff]
          %v998 = vld [vmem:[#allocation2 + $0x68] sm:$0xff]
          %v999 = vld [vmem:[#allocation2 + $0x70] sm:$0xff]
          %v1000 = vld [vmem:[#allocation2 + $0x78] sm:$0xff]
          %v1001 = vld [vmem:[#allocation2 + $0x80] sm:$0xff]
          %v1002 = vld [vmem:[#allocation2 + $0x88] sm:$0xff]
          %v1003 = vld [vmem:[#allocation2 + $0x90] sm:$0xff]
          %v1004 = vld [vmem:[#allocation2 + $0x98] sm:$0xff]
          %v1005 = vld [vmem:[#allocation2 + $0xa0] sm:$0xff]
          %v1006 = vld [vmem:[#allocation2 + $0xa8] sm:$0xff]
          %v1007 = vld [vmem:[#allocation2 + $0xb0] sm:$0xff]
          %v1008 = vld [vmem:[#allocation2 + $0xb8] sm:$0xff]
          %v1009 = vld [vmem:[#allocation2 + $0xc0] sm:$0xff]
          %v1010 = vld [vmem:[#allocation2 + $0xc8] sm:$0xff]
          %v1011 = vld [vmem:[#allocation2 + $0xd0] sm:$0xff]
          %v1012 = vld [vmem:[#allocation2 + $0xd8] sm:$0xff]
          %v1013 = vld [vmem:[#allocation2 + $0xe0] sm:$0xff]
          %v1014 = vld [vmem:[#allocation2 + $0xe8] sm:$0xff]
          %v1015 = vld [vmem:[#allocation2 + $0xf0] sm:$0xff]
          %v1016 = vld [vmem:[#allocation2 + $0xf8] sm:$0xff]
          %v1017 = vld [vmem:[#allocation2 + $0x100] sm:$0xff]
          %v1018 = vld [vmem:[#allocation2 + $0x108] sm:$0xff]
          %v1019 = vld [vmem:[#allocation2 + $0x110] sm:$0xff]
          %v1020 = vld [vmem:[#allocation2 + $0x118] sm:$0xff]
          %v1021 = vld [vmem:[#allocation2 + $0x120] sm:$0xff]
          %v1022 = vld [vmem:[#allocation2 + $0x128] sm:$0xff]
          %v1023 = vld [vmem:[#allocation2 + $0x130] sm:$0xff]
          %v1024 = vld [vmem:[#allocation2 + $0x138] sm:$0xff]
          %v1025 = vld [vmem:[#allocation2 + $0x140] sm:$0xff]
          %v1026 = vld [vmem:[#allocation2 + $0x148] sm:$0xff]
          %v1027 = vld [vmem:[#allocation2 + $0x150] sm:$0xff]
          %v1028 = vld [vmem:[#allocation2 + $0x158] sm:$0xff]
          %v1029 = vld [vmem:[#allocation2 + $0x160] sm:$0xff]
          %v1030 = vld [vmem:[#allocation2 + $0x168] sm:$0xff]
          %v1031 = vld [vmem:[#allocation2 + $0x170] sm:$0xff]
          %v1032 = vld [vmem:[#allocation2 + $0x178] sm:$0xff]
          %v1033 = vld [vmem:[#allocation2 + $0x180] sm:$0xff]
          %v1034 = vld [vmem:[#allocation2 + $0x188] sm:$0xff]
          %v1035 = vld [vmem:[#allocation2 + $0x190] sm:$0xff]
          %v1036 = vld [vmem:[#allocation2 + $0x198] sm:$0xff]
          %v1037 = vld [vmem:[#allocation2 + $0x1a0] sm:$0xff]
          %v1038 = vld [vmem:[#allocation2 + $0x1a8] sm:$0xff]
          %v1039 = vld [vmem:[#allocation2 + $0x1b0] sm:$0xff]
          %v1040 = vld [vmem:[#allocation2 + $0x1b8] sm:$0xff]
          %v1041 = vld [vmem:[#allocation2 + $0x1c0] sm:$0xff]
          %v1042 = vld [vmem:[#allocation2 + $0x1c8] sm:$0xff]
          %v1043 = vld [vmem:[#allocation2 + $0x1d0] sm:$0xff]
          %v1044 = vld [vmem:[#allocation2 + $0x1d8] sm:$0xff]
          %v1045 = vld [vmem:[#allocation2 + $0x1e0] sm:$0xff]
          %v1046 = vld [vmem:[#allocation2 + $0x1e8] sm:$0xff]
          %v1047 = vld [vmem:[#allocation2 + $0x1f0] sm:$0xff]
          %v1048 = vld [vmem:[#allocation2 + $0x1f8] sm:$0xff]
          %v1049 = vmax.f32 %v985, 0.0
          %v1050 = vmax.f32 %v986, 0.0
          %v1051 = vmax.f32 %v987, 0.0
          %v1052 = vmax.f32 %v988, 0.0
          %v1053 = vmax.f32 %v989, 0.0
          %v1054 = vmax.f32 %v990, 0.0
          %v1055 = vmax.f32 %v991, 0.0
          %v1056 = vmax.f32 %v992, 0.0
          %v1057 = vmax.f32 %v993, 0.0
          %v1058 = vmax.f32 %v994, 0.0
          %v1059 = vmax.f32 %v995, 0.0
          %v1060 = vmax.f32 %v996, 0.0
          %v1061 = vmax.f32 %v997, 0.0
          %v1062 = vmax.f32 %v998, 0.0
          %v1063 = vmax.f32 %v999, 0.0
          %v1064 = vmax.f32 %v1000, 0.0
          %v1065 = vmax.f32 %v1001, 0.0
          %v1066 = vmax.f32 %v1002, 0.0
          %v1067 = vmax.f32 %v1003, 0.0
          %v1068 = vmax.f32 %v1004, 0.0
          %v1069 = vmax.f32 %v1005, 0.0
          %v1070 = vmax.f32 %v1006, 0.0
          %v1071 = vmax.f32 %v1007, 0.0
          %v1072 = vmax.f32 %v1008, 0.0
          %v1073 = vmax.f32 %v1009, 0.0
          %v1074 = vmax.f32 %v1010, 0.0
          %v1075 = vmax.f32 %v1011, 0.0
          %v1076 = vmax.f32 %v1012, 0.0
          %v1077 = vmax.f32 %v1013, 0.0
          %v1078 = vmax.f32 %v1014, 0.0
          %v1079 = vmax.f32 %v1015, 0.0
          %v1080 = vmax.f32 %v1016, 0.0
          %v1081 = vmax.f32 %v1017, 0.0
          %v1082 = vmax.f32 %v1018, 0.0
          %v1083 = vmax.f32 %v1019, 0.0
          %v1084 = vmax.f32 %v1020, 0.0
          %v1085 = vmax.f32 %v1021, 0.0
          %v1086 = vmax.f32 %v1022, 0.0
          %v1087 = vmax.f32 %v1023, 0.0
          %v1088 = vmax.f32 %v1024, 0.0
          %v1089 = vmax.f32 %v1025, 0.0
          %v1090 = vmax.f32 %v1026, 0.0
          %v1091 = vmax.f32 %v1027, 0.0
          %v1092 = vmax.f32 %v1028, 0.0
          %v1093 = vmax.f32 %v1029, 0.0
          %v1094 = vmax.f32 %v1030, 0.0
          %v1095 = vmax.f32 %v1031, 0.0
          %v1096 = vmax.f32 %v1032, 0.0
          %v1097 = vmax.f32 %v1033, 0.0
          %v1098 = vmax.f32 %v1034, 0.0
          %v1099 = vmax.f32 %v1035, 0.0
          %v1100 = vmax.f32 %v1036, 0.0
          %v1101 = vmax.f32 %v1037, 0.0
          %v1102 = vmax.f32 %v1038, 0.0
          %v1103 = vmax.f32 %v1039, 0.0
          %v1104 = vmax.f32 %v1040, 0.0
          %v1105 = vmax.f32 %v1041, 0.0
          %v1106 = vmax.f32 %v1042, 0.0
          %v1107 = vmax.f32 %v1043, 0.0
          %v1108 = vmax.f32 %v1044, 0.0
          %v1109 = vmax.f32 %v1045, 0.0
          %v1110 = vmax.f32 %v1046, 0.0
          %v1111 = vmax.f32 %v1047, 0.0
          %v1112 = vmax.f32 %v1048, 0.0
          %1113 = vst [vmem:[%s207] sm:$0xff] %v1049
          %1114 = vst [vmem:[%s207 + $0x8] sm:$0xff] %v1050
          %1115 = vst [vmem:[%s207 + $0x10] sm:$0xff] %v1051
          %1116 = vst [vmem:[%s207 + $0x18] sm:$0xff] %v1052
          %1117 = vst [vmem:[%s207 + $0x20] sm:$0xff] %v1053
          %1118 = vst [vmem:[%s207 + $0x28] sm:$0xff] %v1054
          %1119 = vst [vmem:[%s207 + $0x30] sm:$0xff] %v1055
          %1120 = vst [vmem:[%s207 + $0x38] sm:$0xff] %v1056
          %1121 = vst [vmem:[%s207 + $0x40] sm:$0xff] %v1057
          %1122 = vst [vmem:[%s207 + $0x48] sm:$0xff] %v1058
          %1123 = vst [vmem:[%s207 + $0x50] sm:$0xff] %v1059
          %1124 = vst [vmem:[%s207 + $0x58] sm:$0xff] %v1060
          %1125 = vst [vmem:[%s207 + $0x60] sm:$0xff] %v1061
          %1126 = vst [vmem:[%s207 + $0x68] sm:$0xff] %v1062
          %1127 = vst [vmem:[%s207 + $0x70] sm:$0xff] %v1063
          %1128 = vst [vmem:[%s207 + $0x78] sm:$0xff] %v1064
          %1129 = vst [vmem:[%s207 + $0x80] sm:$0xff] %v1065
          %1130 = vst [vmem:[%s207 + $0x88] sm:$0xff] %v1066
          %1131 = vst [vmem:[%s207 + $0x90] sm:$0xff] %v1067
          %1132 = vst [vmem:[%s207 + $0x98] sm:$0xff] %v1068
          %1133 = vst [vmem:[%s207 + $0xa0] sm:$0xff] %v1069
          %1134 = vst [vmem:[%s207 + $0xa8] sm:$0xff] %v1070
          %1135 = vst [vmem:[%s207 + $0xb0] sm:$0xff] %v1071
          %1136 = vst [vmem:[%s207 + $0xb8] sm:$0xff] %v1072
          %1137 = vst [vmem:[%s207 + $0xc0] sm:$0xff] %v1073
          %1138 = vst [vmem:[%s207 + $0xc8] sm:$0xff] %v1074
          %1139 = vst [vmem:[%s207 + $0xd0] sm:$0xff] %v1075
          %1140 = vst [vmem:[%s207 + $0xd8] sm:$0xff] %v1076
          %1141 = vst [vmem:[%s207 + $0xe0] sm:$0xff] %v1077
          %1142 = vst [vmem:[%s207 + $0xe8] sm:$0xff] %v1078
          %1143 = vst [vmem:[%s207 + $0xf0] sm:$0xff] %v1079
          %1144 = vst [vmem:[%s207 + $0xf8] sm:$0xff] %v1080
          %1145 = vst [vmem:[%s207 + $0x100] sm:$0xff] %v1081
          %1146 = vst [vmem:[%s207 + $0x108] sm:$0xff] %v1082
          %1147 = vst [vmem:[%s207 + $0x110] sm:$0xff] %v1083
          %1148 = vst [vmem:[%s207 + $0x118] sm:$0xff] %v1084
          %1149 = vst [vmem:[%s207 + $0x120] sm:$0xff] %v1085
          %1150 = vst [vmem:[%s207 + $0x128] sm:$0xff] %v1086
          %1151 = vst [vmem:[%s207 + $0x130] sm:$0xff] %v1087
          %1152 = vst [vmem:[%s207 + $0x138] sm:$0xff] %v1088
          %1153 = vst [vmem:[%s207 + $0x140] sm:$0xff] %v1089
          %1154 = vst [vmem:[%s207 + $0x148] sm:$0xff] %v1090
          %1155 = vst [vmem:[%s207 + $0x150] sm:$0xff] %v1091
          %1156 = vst [vmem:[%s207 + $0x158] sm:$0xff] %v1092
          %1157 = vst [vmem:[%s207 + $0x160] sm:$0xff] %v1093
          %1158 = vst [vmem:[%s207 + $0x168] sm:$0xff] %v1094
          %1159 = vst [vmem:[%s207 + $0x170] sm:$0xff] %v1095
          %1160 = vst [vmem:[%s207 + $0x178] sm:$0xff] %v1096
          %1161 = vst [vmem:[%s207 + $0x180] sm:$0xff] %v1097
          %1162 = vst [vmem:[%s207 + $0x188] sm:$0xff] %v1098
          %1163 = vst [vmem:[%s207 + $0x190] sm:$0xff] %v1099
          %1164 = vst [vmem:[%s207 + $0x198] sm:$0xff] %v1100
          %1165 = vst [vmem:[%s207 + $0x1a0] sm:$0xff] %v1101
          %1166 = vst [vmem:[%s207 + $0x1a8] sm:$0xff] %v1102
          %1167 = vst [vmem:[%s207 + $0x1b0] sm:$0xff] %v1103
          %1168 = vst [vmem:[%s207 + $0x1b8] sm:$0xff] %v1104
          %1169 = vst [vmem:[%s207 + $0x1c0] sm:$0xff] %v1105
          %1170 = vst [vmem:[%s207 + $0x1c8] sm:$0xff] %v1106
          %1171 = vst [vmem:[%s207 + $0x1d0] sm:$0xff] %v1107
          %1172 = vst [vmem:[%s207 + $0x1d8] sm:$0xff] %v1108
          %1173 = vst [vmem:[%s207 + $0x1e0] sm:$0xff] %v1109
          %1174 = vst [vmem:[%s207 + $0x1e8] sm:$0xff] %v1110
          %1175 = vst [vmem:[%s207 + $0x1f0] sm:$0xff] %v1111
          %1176 = vst [vmem:[%s207 + $0x1f8] sm:$0xff] %v1112
        $region44: #{tpu_custom_call.1} parent=27 // pred_fallthru
          _
        %s1177 = sand.u32 %s98, 1
        %s1178 = scalar_lea.sflag [#allocation8], %s1177
        %s1179 = sand.u32 %s98, 1
        %s1180 = smul.addr %s1179, 512
        %s1181 = scalar_lea.vmem [#allocation11], %s1180
        // Predicated region
        $region45: #{tpu_custom_call.1} parent=27 // pred_check
          %p1182 = pneg %p108
        $region46: #{tpu_custom_call.1} parent=27 // pred_check_branch
          %1184 = sbr.rel (%p1182) target = $region48
        $region47: #{tpu_custom_call.1} parent=27 // pred_region
          %s1185 = sld [smem:[#allocation4 + %s35]]
          %s1186 = smul.u32 64, %s1185
          %1188 = vsyncadd %s1178, 0
          %s1189 = smul.addr %s1186, 8
          %s1190 = scalar_lea.hbm %s4, %s1189
          %s1191 = sshll.u32 %s1181, 4
          %s1192 = int_to_ptr.vmem [resolvable:$true] %s1191
          %s1193 = sshll.u32 %s1190, 4
          %s1194 = int_to_ptr.hbm [resolvable:$true] %s1193
          %1199 = dma.vmem_to_hbm [thread:$0]  %s1192, 8192, %s1194, %s1178, 128, 128, 8
        $region48: #{tpu_custom_call.1} parent=27 // pred_fallthru
          _
      $region28: #{tpu_custom_call.1} parent=5 // pred_fallthru
        _
      %p1200 = scmp.le.s32.totalorder 2, %s30
      // Predicated region
      $region49: #{tpu_custom_call.1} parent=5 // pred_check
        %p1201 = pneg %p1200
      $region50: #{tpu_custom_call.1} parent=5 // pred_check_branch
        %1203 = sbr.rel (%p1201) target = $region52
      $region51: #{tpu_custom_call.1} parent=5 // pred_region
        %s1204 = ssub.s32 %s30, 2
        // Predicated region
        $region53: #{tpu_custom_call.1} parent=51 // pred_check
          %p1205 = pneg %p114
        $region54: #{tpu_custom_call.1} parent=51 // pred_check_branch
          %1207 = sbr.rel (%p1205) target = $region56
        $region55: #{tpu_custom_call.1} parent=51 // pred_region
          %s1208 = sand.u32 %s99, 1
          %s1209 = scalar_lea.sflag [#allocation8], %s1208
          %s1210 = sand.u32 %s99, 1
          %s1211 = smul.addr %s1210, 512
          %s1212 = scalar_lea.vmem [#allocation11], %s1211
          %1214 = dma.done %s1209, 8192
        $region56: #{tpu_custom_call.1} parent=51 // pred_fallthru
          _
      $region52: #{tpu_custom_call.1} parent=5 // pred_fallthru
        _
    $region6: #{tpu_custom_call.1} parent=1 // loop_footer
      %s34 = sadd.s32 1, %s30
    $region7: #{tpu_custom_call.1} parent=1 // loop_footer_branch
      %29 = sbr.rel target = $region3
    $region8: #{tpu_custom_call.1} parent=1 // loop_exit
      _
    %1215 = vsyncpa [#allocation7], 1
    %s1216 = scalar_lea.sflag [#allocation7], 1
    %1217 = vsyncpa %s1216, 1
    %1218 = vsyncpa [#allocation10], 1
    %1219 = vsyncpa [#allocation8], 1
    %s1220 = scalar_lea.sflag [#allocation8], 1
    %1221 = vsyncpa %s1220, 1

</llo_original>
